<compile_context>
chip_gen: v7x
topology: tpu7x:2x2x1
jax: 0.10.0
libtpu: 0.0.40
codegen_flags: <defaults>
</compile_context>

<pallas_src>
import functools

import jax
import jax.numpy as jnp
from jax.experimental import pallas as pl
from jax.experimental.pallas import tpu as pltpu


def _full_spec(shape):
    # Whole-array block under a size-1 grid.
    return pl.BlockSpec(shape, lambda i: (0,) * len(shape))


# ----------------------------------------------------------------------------
# Fused encoder kernel:
#   GCN layers -> fused heads -> group evidence -> KL scalars -> reparam
# ----------------------------------------------------------------------------

def _encoder_kernel(*refs, num_gc_layers):
    n_in = 3 + 2 * num_gc_layers + 4
    a_ref, x_ref, s_ref = refs[0], refs[1], refs[2]
    gc_refs = refs[3:3 + 2 * num_gc_layers]
    wh_ref, bh_ref, eps_n_ref, eps_g_ref = refs[3 + 2 * num_gc_layers:n_in]
    node_lat_ref, group_lat_ref, nkl_ref, ckl_ref = refs[n_in:]

    # ---- GCN message passing (bf16 MXU, f32 accumulation) ----------------
    a_bf = a_ref[...].astype(jnp.bfloat16)
    h = x_ref[...]
    for l in range(num_gc_layers):
        w = gc_refs[2 * l][...]
        b = gc_refs[2 * l + 1][...]
        h_bf = h.astype(jnp.bfloat16)
        w_bf = w.astype(jnp.bfloat16)
        if h.shape[1] <= w.shape[1]:
            # (A @ H) @ W : keeps the N^2 term on the smaller feature dim.
            ah = jnp.dot(a_bf, h_bf, preferred_element_type=jnp.float32)
            z = jnp.dot(ah.astype(jnp.bfloat16), w_bf,
                        preferred_element_type=jnp.float32)
        else:
            # A @ (H @ W)
            hw = jnp.dot(h_bf, w_bf, preferred_element_type=jnp.float32)
            z = jnp.dot(a_bf, hw.astype(jnp.bfloat16),
                        preferred_element_type=jnp.float32)
        h = jnp.maximum(z + b, 0.0)

    # ---- Four linear heads as ONE [H, 4H] matmul --------------------------
    heads = jnp.dot(h.astype(jnp.bfloat16), wh_ref[...].astype(jnp.bfloat16),
                    preferred_element_type=jnp.float32) + bh_ref[...]
    hd = heads.shape[1] // 4
    node_mu = heads[:, 0:hd]
    node_lv = heads[:, hd:2 * hd]
    class_mu = heads[:, 2 * hd:3 * hd]
    class_lv = heads[:, 3 * hd:4 * hd]

    # ---- Precision-weighted group evidence (ML-VAE style) -----------------
    #   group_var = 1 / sum_i 1/var_i ; group_mu = group_var * sum_i mu_i/var_i
    s = s_ref[...]                                                   # [G, N]
    inv_var = jnp.exp(-class_lv)                                     # [N, H]
    sum_inv = jnp.maximum(
        jnp.dot(s, inv_var, preferred_element_type=jnp.float32), 1e-8)
    gvar = pl.reciprocal(sum_inv, approx=True)                       # EUP vrcp
    gmu = gvar * jnp.dot(s, class_mu * inv_var,
                         preferred_element_type=jnp.float32)
    glv = -jnp.log(sum_inv)

    # ---- KL scalars --------------------------------------------------------
    nkl = -0.5 * jnp.sum(1.0 + node_lv - node_mu * node_mu - jnp.exp(node_lv))
    ckl = -0.5 * jnp.sum(1.0 + glv - gmu * gmu - jnp.exp(glv))
    nkl_ref[...] = jnp.broadcast_to(nkl, (1, 1))
    ckl_ref[...] = jnp.broadcast_to(ckl, (1, 1))

    # ---- Reparameterization -----------------------------------------------
    node_lat_ref[...] = node_mu + eps_n_ref[...] * jnp.exp(0.5 * node_lv)
    group_lat_ref[...] = gmu + eps_g_ref[...] * jnp.exp(0.5 * glv)


def encoder_forward(params, x, a_hat, s_onehot, eps_node, eps_group,
                    num_gc_layers):
    n = x.shape[0]
    g = s_onehot.shape[0]
    hdim = params["W_heads"].shape[1] // 4

    inputs = [a_hat, x, s_onehot]
    for l in range(num_gc_layers):
        inputs += [params[f"W_gc{l}"], params[f"b_gc{l}"]]
    inputs += [params["W_heads"], params["b_heads"], eps_node, eps_group]

    out_shape = (jax.ShapeDtypeStruct((n, hdim), jnp.float32),   # node_latent
                 jax.ShapeDtypeStruct((g, hdim), jnp.float32),   # group_latent
                 jax.ShapeDtypeStruct((1, 1), jnp.float32),      # node KL sum
                 jax.ShapeDtypeStruct((1, 1), jnp.float32))      # class KL sum
    out_specs = (_full_spec((n, hdim)), _full_spec((g, hdim)),
                 _full_spec((1, 1)), _full_spec((1, 1)))

    return pl.pallas_call(
        functools.partial(_encoder_kernel, num_gc_layers=num_gc_layers),
        out_shape=out_shape,
        grid=(1,),
        in_specs=[_full_spec(v.shape) for v in inputs],
        out_specs=out_specs,
    )(*inputs)


# ----------------------------------------------------------------------------
# Fused decoder + reconstruction-loss kernel (grid over graphs, parallel)
# ----------------------------------------------------------------------------

def _decoder_recon_kernel(nl_ref, gl_ref, adj_ref, w1n_ref, w1c_ref, b1_ref,
                          w2_ref, b2_ref, o_ref):
    g = pl.program_id(0)

    node_lat = nl_ref[...].astype(jnp.bfloat16)            # [M, H]
    grp = gl_ref[pl.ds(g, 1), :].astype(jnp.bfloat16)      # [1, H] (group_wise
    # reparameterized class latent for this graph, broadcast to all its nodes)

    # h1 = relu(node_lat @ Wd1_node + class_lat @ Wd1_class + b1)  (no concat)
    h1 = (jnp.dot(node_lat, w1n_ref[...].astype(jnp.bfloat16),
                  preferred_element_type=jnp.float32)
          + jnp.dot(grp, w1c_ref[...].astype(jnp.bfloat16),
                    preferred_element_type=jnp.float32)
          + b1_ref[...])
    h1 = jnp.maximum(h1, 0.0)

    z = (jnp.dot(h1.astype(jnp.bfloat16), w2_ref[...].astype(jnp.bfloat16),
                 preferred_element_type=jnp.float32) + b2_ref[...])   # [M, F]

    zb = z.astype(jnp.bfloat16)
    rec = jax.lax.dot_general(zb, zb, (((1,), (1,)), ((), ())),
                              preferred_element_type=jnp.float32)     # [M, M]
    y = adj_ref[...]                                                  # [M, M]
    # BCE-with-logits, overflow-safe form: max(x,0) - x*y + log(1 + exp(-|x|))
    bce = jnp.maximum(rec, 0.0) - rec * y + jnp.log(1.0 + jnp.exp(-jnp.abs(rec)))
    o_ref[...] = jnp.sum(bce, keepdims=True)


def decoder_recon(params, node_latent, group_latent, adj_dense):
    g, m, _ = adj_dense.shape
    hdim = node_latent.shape[1]

    return pl.pallas_call(
        _decoder_recon_kernel,
        out_shape=jax.ShapeDtypeStruct((g, 1), jnp.float32),
        grid=(g,),
        in_specs=[
            pl.BlockSpec((m, hdim), lambda i: (i, 0)),          # this graph's nodes
            pl.BlockSpec(group_latent.shape, lambda i: (0, 0)),  # all group latents
            pl.BlockSpec((pl.Squeezed(), m, m), lambda i: (i, 0, 0)),
            pl.BlockSpec(params["W_d1n"].shape, lambda i: (0, 0)),
            pl.BlockSpec(params["W_d1c"].shape, lambda i: (0, 0)),
            pl.BlockSpec(params["b_d1"].shape, lambda i: (0, 0)),
            pl.BlockSpec(params["W_d2"].shape, lambda i: (0, 0)),
            pl.BlockSpec(params["b_d2"].shape, lambda i: (0, 0)),
        ],
        out_specs=pl.BlockSpec((1, 1), lambda i: (i, 0)),        # per-graph partial
        compiler_params=pltpu.CompilerParams(
            dimension_semantics=("parallel",)),                  # 2 TCs on v7x
    )(node_latent, group_latent, adj_dense,
      params["W_d1n"], params["W_d1c"], params["b_d1"],
      params["W_d2"], params["b_d2"])


# ----------------------------------------------------------------------------
# Model (parameter setup + forward glue)
# ----------------------------------------------------------------------------

def xavier_uniform(key, fan_in, fan_out):
    bound = (6.0 / (fan_in + fan_out)) ** 0.5
    return jax.random.uniform(key, (fan_in, fan_out), jnp.float32, -bound, bound)


def init_params(key, ft_size, hidden_dim, num_gc_layers):
    params = {}
    keys = iter(jax.random.split(key, 4 * num_gc_layers + 16))
    fin = ft_size
    for l in range(num_gc_layers):
        params[f"W_gc{l}"] = xavier_uniform(next(keys), fin, hidden_dim)
        params[f"b_gc{l}"] = jnp.zeros((1, hidden_dim), jnp.float32)
        fin = hidden_dim
    # Four heads fused into one lane-dense [H, 4H] weight:
    # [node_mu | node_logvar | class_mu | class_logvar]
    heads = [xavier_uniform(next(keys), hidden_dim, hidden_dim) for _ in range(4)]
    params["W_heads"] = jnp.concatenate(heads, axis=1)
    params["b_heads"] = jnp.zeros((1, 4 * hidden_dim), jnp.float32)
    # Decoder MLP on [node || class]; first layer split so no concat is needed.
    w_d1 = xavier_uniform(next(keys), 2 * hidden_dim, hidden_dim)
    params["W_d1n"] = w_d1[:hidden_dim]
    params["W_d1c"] = w_d1[hidden_dim:]
    params["b_d1"] = jnp.zeros((1, hidden_dim), jnp.float32)
    params["W_d2"] = xavier_uniform(next(keys), hidden_dim, ft_size)
    params["b_d2"] = jnp.zeros((1, ft_size), jnp.float32)
    return params


def gcn_infomax_forward(params, x, a_hat, adj_dense, s_onehot,
                        eps_node, eps_group, num_graphs, num_gc_layers):
    node_latent, group_latent, node_kl_sum, class_kl_sum = encoder_forward(
        params, x, a_hat, s_onehot, eps_node, eps_group, num_gc_layers)

    node_kl = 1e-07 * node_kl_sum[0, 0] * num_graphs
    class_kl = 1e-07 * class_kl_sum[0, 0] * num_graphs

    bce_per_graph = decoder_recon(params, node_latent, group_latent, adj_dense)
    recon_loss = jnp.sum(bce_per_graph) / float(adj_dense.size)   # mean reduction
    recon_err = 0.01 * recon_loss * num_graphs

    return recon_err, class_kl, node_kl


# ----------------------------------------------------------------------------
# Main
# ----------------------------------------------------------------------------

if __name__ == "__main__":
    G, M = 4, 8                    # 4 graphs, 8 nodes each (equal-size batch)
    N = G * M
    ft_size, hidden_dim, num_gc_layers = 32, 128, 2   # hidden lane-dense (128)

    key = jax.random.PRNGKey(0)
    k_param, k_x, k_eps_n, k_eps_g = jax.random.split(key, 4)

    # ring graph per component
    edges = []
    for gi in range(G):
        for i in range(M):
            u = gi * M + i
            v = gi * M + (i + 1) % M
            edges.append((u, v))
            edges.append((v, u))
    edge_index = jnp.array(edges, dtype=jnp.int32).T                  # [2, E]

    adj = jnp.zeros((N, N), jnp.float32).at[edge_index[0], edge_index[1]].set(1.0)
    # normalized adjacency with self-loops for the GCN encoder
    a_self = adj + jnp.eye(N, dtype=jnp.float32)
    deg = jnp.sum(a_self, axis=1)
    d_inv_sqrt = 1.0 / jnp.sqrt(deg)
    a_hat = a_self * d_inv_sqrt[:, None] * d_inv_sqrt[None, :]

    batch = jnp.repeat(jnp.arange(G, dtype=jnp.int32), M)             # [N]
    s_onehot = jax.nn.one_hot(batch, G, dtype=jnp.float32).T          # [G, N]

    # dense per-graph adjacency (to_dense_adj; equal-size graphs)
    adj_dense = jnp.stack(
        [adj[gi * M:(gi + 1) * M, gi * M:(gi + 1) * M] for gi in range(G)], axis=0)

    x = jax.random.normal(k_x, (N, ft_size), jnp.float32)
    eps_node = jax.random.normal(k_eps_n, (N, hidden_dim), jnp.float32)
    eps_group = jax.random.normal(k_eps_g, (G, hidden_dim), jnp.float32)

    params = init_params(k_param, ft_size, hidden_dim, num_gc_layers)

    recon_err, class_kl, node_kl = gcn_infomax_forward(
        params, x, a_hat, adj_dense, s_onehot,
        eps_node, eps_group, num_graphs=G, num_gc_layers=num_gc_layers)

    jax.block_until_ready((recon_err, class_kl, node_kl))
    print("KERNEL_OK")
</pallas_src>

<mosaic_0001>
module attributes {stable_mosaic.version = 11 : i64} {
  func.func @_encoder_kernel(%arg0: i32, %arg1: memref<32x32xf32, #tpu.memory_space<vmem>>, %arg2: memref<32x32xf32, #tpu.memory_space<vmem>>, %arg3: memref<4x32xf32, #tpu.memory_space<vmem>>, %arg4: memref<32x128xf32, #tpu.memory_space<vmem>>, %arg5: memref<1x128xf32, #tpu.memory_space<vmem>>, %arg6: memref<128x128xf32, #tpu.memory_space<vmem>>, %arg7: memref<1x128xf32, #tpu.memory_space<vmem>>, %arg8: memref<128x512xf32, #tpu.memory_space<vmem>>, %arg9: memref<1x512xf32, #tpu.memory_space<vmem>>, %arg10: memref<32x128xf32, #tpu.memory_space<vmem>>, %arg11: memref<4x128xf32, #tpu.memory_space<vmem>>, %arg12: memref<32x128xf32, #tpu.memory_space<vmem>>, %arg13: memref<4x128xf32, #tpu.memory_space<vmem>>, %arg14: memref<1x1xf32, #tpu.memory_space<vmem>>, %arg15: memref<1x1xf32, #tpu.memory_space<vmem>>) attributes {dimension_semantics = [#tpu.dimension_semantics<arbitrary>], iteration_bounds = array<i64: 1>, scalar_prefetch = 0 : i64, scratch_operands = 0 : i64, tpu.core_type = #tpu.core_type<tc>, window_params = [{pipeline_mode = #tpu.pipeline_mode<synchronous>, transform_indices = @transform_0, window_bounds = array<i64: 32, 32>}, {pipeline_mode = #tpu.pipeline_mode<synchronous>, transform_indices = @transform_1, window_bounds = array<i64: 32, 32>}, {pipeline_mode = #tpu.pipeline_mode<synchronous>, transform_indices = @transform_2, window_bounds = array<i64: 4, 32>}, {pipeline_mode = #tpu.pipeline_mode<synchronous>, transform_indices = @transform_3, window_bounds = array<i64: 32, 128>}, {pipeline_mode = #tpu.pipeline_mode<synchronous>, transform_indices = @transform_4, window_bounds = array<i64: 1, 128>}, {pipeline_mode = #tpu.pipeline_mode<synchronous>, transform_indices = @transform_5, window_bounds = array<i64: 128, 128>}, {pipeline_mode = #tpu.pipeline_mode<synchronous>, transform_indices = @transform_6, window_bounds = array<i64: 1, 128>}, {pipeline_mode = #tpu.pipeline_mode<synchronous>, transform_indices = @transform_7, window_bounds = array<i64: 128, 512>}, {pipeline_mode = #tpu.pipeline_mode<synchronous>, transform_indices = @transform_8, window_bounds = array<i64: 1, 512>}, {pipeline_mode = #tpu.pipeline_mode<synchronous>, transform_indices = @transform_9, window_bounds = array<i64: 32, 128>}, {pipeline_mode = #tpu.pipeline_mode<synchronous>, transform_indices = @transform_10, window_bounds = array<i64: 4, 128>}, {pipeline_mode = #tpu.pipeline_mode<synchronous>, transform_indices = @transform_11, window_bounds = array<i64: 32, 128>}, {pipeline_mode = #tpu.pipeline_mode<synchronous>, transform_indices = @transform_12, window_bounds = array<i64: 4, 128>}, {pipeline_mode = #tpu.pipeline_mode<synchronous>, transform_indices = @transform_13, window_bounds = array<i64: 1, 1>}, {pipeline_mode = #tpu.pipeline_mode<synchronous>, transform_indices = @transform_14, window_bounds = array<i64: 1, 1>}]} {
    %c0 = arith.constant 0 : index
    %c0_0 = arith.constant 0 : index
    %0 = vector.load %arg1[%c0, %c0_0] : memref<32x32xf32, #tpu.memory_space<vmem>>, vector<32x32xf32>
    %1 = arith.truncf %0 : vector<32x32xf32> to vector<32x32xbf16>
    %c0_1 = arith.constant 0 : index
    %c0_2 = arith.constant 0 : index
    %2 = vector.load %arg2[%c0_1, %c0_2] : memref<32x32xf32, #tpu.memory_space<vmem>>, vector<32x32xf32>
    %c0_3 = arith.constant 0 : index
    %c0_4 = arith.constant 0 : index
    %3 = vector.load %arg4[%c0_3, %c0_4] : memref<32x128xf32, #tpu.memory_space<vmem>>, vector<32x128xf32>
    %c0_5 = arith.constant 0 : index
    %c0_6 = arith.constant 0 : index
    %4 = vector.load %arg5[%c0_5, %c0_6] : memref<1x128xf32, #tpu.memory_space<vmem>>, vector<1x128xf32>
    %5 = arith.truncf %2 : vector<32x32xf32> to vector<32x32xbf16>
    %6 = arith.truncf %3 : vector<32x128xf32> to vector<32x128xbf16>
    %cst = arith.constant dense<0.000000e+00> : vector<32x32xf32>
    %7 = tpu.matmul %1, %5, %cst {dimension_numbers = #tpu.dot_dimension_numbers<[1], [0], [0], [1], [0, 0, 1, 1], [], []>} : vector<32x32xbf16>, vector<32x32xbf16>, vector<32x32xf32> -> vector<32x32xf32>
    %8 = arith.truncf %7 : vector<32x32xf32> to vector<32x32xbf16>
    %cst_7 = arith.constant dense<0.000000e+00> : vector<32x128xf32>
    %9 = tpu.matmul %8, %6, %cst_7 {dimension_numbers = #tpu.dot_dimension_numbers<[1], [0], [0], [1], [0, 0, 1, 1], [], []>} : vector<32x32xbf16>, vector<32x128xbf16>, vector<32x128xf32> -> vector<32x128xf32>
    %10 = vector.broadcast %4 : vector<1x128xf32> to vector<32x128xf32>
    %11 = arith.addf %9, %10 : vector<32x128xf32>
    %cst_8 = arith.constant 0.000000e+00 : f32
    %12 = vector.broadcast %cst_8 : f32 to vector<32x128xf32>
    %13 = arith.maximumf %11, %12 : vector<32x128xf32>
    %c0_9 = arith.constant 0 : index
    %c0_10 = arith.constant 0 : index
    %14 = vector.load %arg6[%c0_9, %c0_10] : memref<128x128xf32, #tpu.memory_space<vmem>>, vector<128x128xf32>
    %c0_11 = arith.constant 0 : index
    %c0_12 = arith.constant 0 : index
    %15 = vector.load %arg7[%c0_11, %c0_12] : memref<1x128xf32, #tpu.memory_space<vmem>>, vector<1x128xf32>
    %16 = arith.truncf %13 : vector<32x128xf32> to vector<32x128xbf16>
    %17 = arith.truncf %14 : vector<128x128xf32> to vector<128x128xbf16>
    %cst_13 = arith.constant dense<0.000000e+00> : vector<32x128xf32>
    %18 = tpu.matmul %1, %16, %cst_13 {dimension_numbers = #tpu.dot_dimension_numbers<[1], [0], [0], [1], [0, 0, 1, 1], [], []>} : vector<32x32xbf16>, vector<32x128xbf16>, vector<32x128xf32> -> vector<32x128xf32>
    %19 = arith.truncf %18 : vector<32x128xf32> to vector<32x128xbf16>
    %cst_14 = arith.constant dense<0.000000e+00> : vector<32x128xf32>
    %20 = tpu.matmul %19, %17, %cst_14 {dimension_numbers = #tpu.dot_dimension_numbers<[1], [0], [0], [1], [0, 0, 1, 1], [], []>} : vector<32x128xbf16>, vector<128x128xbf16>, vector<32x128xf32> -> vector<32x128xf32>
    %21 = vector.broadcast %15 : vector<1x128xf32> to vector<32x128xf32>
    %22 = arith.addf %20, %21 : vector<32x128xf32>
    %cst_15 = arith.constant 0.000000e+00 : f32
    %23 = vector.broadcast %cst_15 : f32 to vector<32x128xf32>
    %24 = arith.maximumf %22, %23 : vector<32x128xf32>
    %25 = arith.truncf %24 : vector<32x128xf32> to vector<32x128xbf16>
    %c0_16 = arith.constant 0 : index
    %c0_17 = arith.constant 0 : index
    %26 = vector.load %arg8[%c0_16, %c0_17] : memref<128x512xf32, #tpu.memory_space<vmem>>, vector<128x512xf32>
    %27 = arith.truncf %26 : vector<128x512xf32> to vector<128x512xbf16>
    %cst_18 = arith.constant dense<0.000000e+00> : vector<32x512xf32>
    %28 = tpu.matmul %25, %27, %cst_18 {dimension_numbers = #tpu.dot_dimension_numbers<[1], [0], [0], [1], [0, 0, 1, 1], [], []>} : vector<32x128xbf16>, vector<128x512xbf16>, vector<32x512xf32> -> vector<32x512xf32>
    %c0_19 = arith.constant 0 : index
    %c0_20 = arith.constant 0 : index
    %29 = vector.load %arg9[%c0_19, %c0_20] : memref<1x512xf32, #tpu.memory_space<vmem>>, vector<1x512xf32>
    %30 = vector.broadcast %29 : vector<1x512xf32> to vector<32x512xf32>
    %31 = arith.addf %28, %30 : vector<32x512xf32>
    %32 = vector.extract_strided_slice %31 {offsets = [0, 0], sizes = [32, 128], strides = [1, 1]} : vector<32x512xf32> to vector<32x128xf32>
    %33 = vector.extract_strided_slice %31 {offsets = [0, 128], sizes = [32, 128], strides = [1, 1]} : vector<32x512xf32> to vector<32x128xf32>
    %34 = vector.extract_strided_slice %31 {offsets = [0, 256], sizes = [32, 128], strides = [1, 1]} : vector<32x512xf32> to vector<32x128xf32>
    %35 = vector.extract_strided_slice %31 {offsets = [0, 384], sizes = [32, 128], strides = [1, 1]} : vector<32x512xf32> to vector<32x128xf32>
    %c0_21 = arith.constant 0 : index
    %c0_22 = arith.constant 0 : index
    %36 = vector.load %arg3[%c0_21, %c0_22] : memref<4x32xf32, #tpu.memory_space<vmem>>, vector<4x32xf32>
    %cst_23 = arith.constant 0.000000e+00 : f32
    %37 = vector.broadcast %cst_23 : f32 to vector<32x128xf32>
    %38 = arith.subf %37, %35 : vector<32x128xf32>
    %39 = math.exp %38 : vector<32x128xf32>
    %cst_24 = arith.constant dense<0.000000e+00> : vector<4x128xf32>
    %40 = tpu.matmul %36, %39, %cst_24 {dimension_numbers = #tpu.dot_dimension_numbers<[1], [0], [0], [1], [0, 0, 1, 1], [], []>} : vector<4x32xf32>, vector<32x128xf32>, vector<4x128xf32> -> vector<4x128xf32>
    %cst_25 = arith.constant 9.99999993E-9 : f32
    %41 = vector.broadcast %cst_25 : f32 to vector<4x128xf32>
    %42 = arith.maximumf %40, %41 : vector<4x128xf32>
    %43 = tpu.reciprocal %42 {approx = true} : vector<4x128xf32> -> vector<4x128xf32>
    %44 = arith.mulf %34, %39 : vector<32x128xf32>
    %cst_26 = arith.constant dense<0.000000e+00> : vector<4x128xf32>
    %45 = tpu.matmul %36, %44, %cst_26 {dimension_numbers = #tpu.dot_dimension_numbers<[1], [0], [0], [1], [0, 0, 1, 1], [], []>} : vector<4x32xf32>, vector<32x128xf32>, vector<4x128xf32> -> vector<4x128xf32>
    %46 = arith.mulf %43, %45 : vector<4x128xf32>
    %47 = math.log %42 : vector<4x128xf32>
    %cst_27 = arith.constant 0.000000e+00 : f32
    %48 = vector.broadcast %cst_27 : f32 to vector<4x128xf32>
    %49 = arith.subf %48, %47 : vector<4x128xf32>
    %cst_28 = arith.constant 1.000000e+00 : f32
    %50 = vector.broadcast %cst_28 : f32 to vector<32x128xf32>
    %51 = arith.addf %50, %33 : vector<32x128xf32>
    %52 = arith.mulf %32, %32 : vector<32x128xf32>
    %53 = arith.subf %51, %52 : vector<32x128xf32>
    %54 = math.exp %33 : vector<32x128xf32>
    %55 = arith.subf %53, %54 : vector<32x128xf32>
    %56 = vector.shape_cast %55 : vector<32x128xf32> to vector<1x32x128xf32>
    %cst_29 = arith.constant dense<0.000000e+00> : vector<1xf32>
    %57 = vector.multi_reduction <add>, %56, %cst_29 [1, 2] : vector<1x32x128xf32> to vector<1xf32>
    %58 = vector.shape_cast %57 : vector<1xf32> to vector<1x1x1xf32>
    %59 = vector.extract %58[0, 0, 0] : f32 from vector<1x1x1xf32>
    %cst_30 = arith.constant -5.000000e-01 : f32
    %60 = arith.mulf %cst_30, %59 : f32
    %cst_31 = arith.constant 1.000000e+00 : f32
    %61 = vector.broadcast %cst_31 : f32 to vector<4x128xf32>
    %62 = arith.addf %61, %49 : vector<4x128xf32>
    %63 = arith.mulf %46, %46 : vector<4x128xf32>
    %64 = arith.subf %62, %63 : vector<4x128xf32>
    %65 = math.exp %49 : vector<4x128xf32>
    %66 = arith.subf %64, %65 : vector<4x128xf32>
    %67 = vector.shape_cast %66 : vector<4x128xf32> to vector<1x4x128xf32>
    %cst_32 = arith.constant dense<0.000000e+00> : vector<1xf32>
    %68 = vector.multi_reduction <add>, %67, %cst_32 [1, 2] : vector<1x4x128xf32> to vector<1xf32>
    %69 = vector.shape_cast %68 : vector<1xf32> to vector<1x1x1xf32>
    %70 = vector.extract %69[0, 0, 0] : f32 from vector<1x1x1xf32>
    %cst_33 = arith.constant -5.000000e-01 : f32
    %71 = arith.mulf %cst_33, %70 : f32
    %72 = vector.broadcast %60 : f32 to vector<1x1xf32>
    %c0_34 = arith.constant 0 : index
    %c0_35 = arith.constant 0 : index
    %73 = vector.load %arg14[%c0_34, %c0_35] : memref<1x1xf32, #tpu.memory_space<vmem>>, vector<1x1xf32>
    tpu.vector_store %arg14[%c0_34, %c0_35], %72 {strides = array<i32>} : memref<1x1xf32, #tpu.memory_space<vmem>>, vector<1x1xf32>,
    %74 = vector.broadcast %71 : f32 to vector<1x1xf32>
    %c0_36 = arith.constant 0 : index
    %c0_37 = arith.constant 0 : index
    %75 = vector.load %arg15[%c0_36, %c0_37] : memref<1x1xf32, #tpu.memory_space<vmem>>, vector<1x1xf32>
    tpu.vector_store %arg15[%c0_36, %c0_37], %74 {strides = array<i32>} : memref<1x1xf32, #tpu.memory_space<vmem>>, vector<1x1xf32>,
    %c0_38 = arith.constant 0 : index
    %c0_39 = arith.constant 0 : index
    %76 = vector.load %arg10[%c0_38, %c0_39] : memref<32x128xf32, #tpu.memory_space<vmem>>, vector<32x128xf32>
    %cst_40 = arith.constant 5.000000e-01 : f32
    %77 = vector.broadcast %cst_40 : f32 to vector<32x128xf32>
    %78 = arith.mulf %77, %33 : vector<32x128xf32>
    %79 = math.exp %78 : vector<32x128xf32>
    %80 = arith.mulf %76, %79 : vector<32x128xf32>
    %81 = arith.addf %32, %80 : vector<32x128xf32>
    %c0_41 = arith.constant 0 : index
    %c0_42 = arith.constant 0 : index
    %82 = vector.load %arg12[%c0_41, %c0_42] : memref<32x128xf32, #tpu.memory_space<vmem>>, vector<32x128xf32>
    tpu.vector_store %arg12[%c0_41, %c0_42], %81 {strides = array<i32>} : memref<32x128xf32, #tpu.memory_space<vmem>>, vector<32x128xf32>,
    %c0_43 = arith.constant 0 : index
    %c0_44 = arith.constant 0 : index
    %83 = vector.load %arg11[%c0_43, %c0_44] : memref<4x128xf32, #tpu.memory_space<vmem>>, vector<4x128xf32>
    %cst_45 = arith.constant 5.000000e-01 : f32
    %84 = vector.broadcast %cst_45 : f32 to vector<4x128xf32>
    %85 = arith.mulf %84, %49 : vector<4x128xf32>
    %86 = math.exp %85 : vector<4x128xf32>
    %87 = arith.mulf %83, %86 : vector<4x128xf32>
    %88 = arith.addf %46, %87 : vector<4x128xf32>
    %c0_46 = arith.constant 0 : index
    %c0_47 = arith.constant 0 : index
    %89 = vector.load %arg13[%c0_46, %c0_47] : memref<4x128xf32, #tpu.memory_space<vmem>>, vector<4x128xf32>
    tpu.vector_store %arg13[%c0_46, %c0_47], %88 {strides = array<i32>} : memref<4x128xf32, #tpu.memory_space<vmem>>, vector<4x128xf32>,
    return
  }
  func.func @transform_0(%arg0: i32) -> (i32, i32) {
    %c0_i32 = arith.constant 0 : i32
    %c0_i32_0 = arith.constant 0 : i32
    %c0_i32_1 = arith.constant 0 : i32
    return %c0_i32, %c0_i32_0 : i32, i32
  }
  func.func @transform_1(%arg0: i32) -> (i32, i32) {
    %c0_i32 = arith.constant 0 : i32
    %c0_i32_0 = arith.constant 0 : i32
    %c0_i32_1 = arith.constant 0 : i32
    return %c0_i32, %c0_i32_0 : i32, i32
  }
  func.func @transform_2(%arg0: i32) -> (i32, i32) {
    %c0_i32 = arith.constant 0 : i32
    %c0_i32_0 = arith.constant 0 : i32
    %c0_i32_1 = arith.constant 0 : i32
    return %c0_i32, %c0_i32_0 : i32, i32
  }
  func.func @transform_3(%arg0: i32) -> (i32, i32) {
    %c0_i32 = arith.constant 0 : i32
    %c0_i32_0 = arith.constant 0 : i32
    %c0_i32_1 = arith.constant 0 : i32
    return %c0_i32, %c0_i32_0 : i32, i32
  }
  func.func @transform_4(%arg0: i32) -> (i32, i32) {
    %c0_i32 = arith.constant 0 : i32
    %c0_i32_0 = arith.constant 0 : i32
    %c0_i32_1 = arith.constant 0 : i32
    return %c0_i32, %c0_i32_0 : i32, i32
  }
  func.func @transform_5(%arg0: i32) -> (i32, i32) {
    %c0_i32 = arith.constant 0 : i32
    %c0_i32_0 = arith.constant 0 : i32
    %c0_i32_1 = arith.constant 0 : i32
    return %c0_i32, %c0_i32_0 : i32, i32
  }
  func.func @transform_6(%arg0: i32) -> (i32, i32) {
    %c0_i32 = arith.constant 0 : i32
    %c0_i32_0 = arith.constant 0 : i32
    %c0_i32_1 = arith.constant 0 : i32
    return %c0_i32, %c0_i32_0 : i32, i32
  }
  func.func @transform_7(%arg0: i32) -> (i32, i32) {
    %c0_i32 = arith.constant 0 : i32
    %c0_i32_0 = arith.constant 0 : i32
    %c0_i32_1 = arith.constant 0 : i32
    return %c0_i32, %c0_i32_0 : i32, i32
  }
  func.func @transform_8(%arg0: i32) -> (i32, i32) {
    %c0_i32 = arith.constant 0 : i32
    %c0_i32_0 = arith.constant 0 : i32
    %c0_i32_1 = arith.constant 0 : i32
    return %c0_i32, %c0_i32_0 : i32, i32
  }
  func.func @transform_9(%arg0: i32) -> (i32, i32) {
    %c0_i32 = arith.constant 0 : i32
    %c0_i32_0 = arith.constant 0 : i32
    %c0_i32_1 = arith.constant 0 : i32
    return %c0_i32, %c0_i32_0 : i32, i32
  }
  func.func @transform_10(%arg0: i32) -> (i32, i32) {
    %c0_i32 = arith.constant 0 : i32
    %c0_i32_0 = arith.constant 0 : i32
    %c0_i32_1 = arith.constant 0 : i32
    return %c0_i32, %c0_i32_0 : i32, i32
  }
  func.func @transform_11(%arg0: i32) -> (i32, i32) {
    %c0_i32 = arith.constant 0 : i32
    %c0_i32_0 = arith.constant 0 : i32
    %c0_i32_1 = arith.constant 0 : i32
    return %c0_i32, %c0_i32_0 : i32, i32
  }
  func.func @transform_12(%arg0: i32) -> (i32, i32) {
    %c0_i32 = arith.constant 0 : i32
    %c0_i32_0 = arith.constant 0 : i32
    %c0_i32_1 = arith.constant 0 : i32
    return %c0_i32, %c0_i32_0 : i32, i32
  }
  func.func @transform_13(%arg0: i32) -> (i32, i32) {
    %c0_i32 = arith.constant 0 : i32
    %c0_i32_0 = arith.constant 0 : i32
    %c0_i32_1 = arith.constant 0 : i32
    return %c0_i32, %c0_i32_0 : i32, i32
  }
  func.func @transform_14(%arg0: i32) -> (i32, i32) {
    %c0_i32 = arith.constant 0 : i32
    %c0_i32_0 = arith.constant 0 : i32
    %c0_i32_1 = arith.constant 0 : i32
    return %c0_i32, %c0_i32_0 : i32, i32
  }
}

</mosaic_0001>

<llo_original>
// kernel: tpu_custom_call.1
$region0: #{tpu_custom_call.1}
  #allocation0 [shape = 'u32[]', space=smem, size = 0x4, offset = 0x4, fixed_abs, tag = 'smem constant byte address 0x4 - core index']
  #allocation1 [shape = 'u32[144,128]{1,0:T(1,128)}', space=vmem, size = 0x12000, scoped, tag = 'internal scratch']
  %s0 = inlined_call_operand.hbm [shape: f32[32,32], index: 0, kind: input, shape index: {}]
  %s1 = inlined_call_operand.hbm [shape: f32[32,32], index: 1, kind: input, shape index: {}]
  %s2 = inlined_call_operand.hbm [shape: f32[4,32], index: 2, kind: input, shape index: {}]
  %s3 = inlined_call_operand.hbm [shape: f32[32,128], index: 3, kind: input, shape index: {}]
  %s4 = inlined_call_operand.vmem [shape: f32[1,128], index: 4, kind: input, shape index: {}]
  %s5 = inlined_call_operand.hbm [shape: f32[128,128], index: 5, kind: input, shape index: {}]
  %s6 = inlined_call_operand.hbm [shape: f32[1,128], index: 6, kind: input, shape index: {}]
  %s7 = inlined_call_operand.hbm [shape: f32[128,512], index: 7, kind: input, shape index: {}]
  %s8 = inlined_call_operand.hbm [shape: f32[1,512], index: 8, kind: input, shape index: {}]
  %s9 = inlined_call_operand.vmem [shape: f32[32,128], index: 9, kind: input, shape index: {}]
  %s10 = inlined_call_operand.vmem [shape: f32[4,128], index: 10, kind: input, shape index: {}]
  %s11 = inlined_call_operand.hbm [shape: f32[32,128], index: 11, kind: output, shape index: {0}]
  %s12 = inlined_call_operand.hbm [shape: f32[4,128], index: 12, kind: output, shape index: {1}]
  %s13 = inlined_call_operand.hbm [shape: f32[1,1], index: 13, kind: output, shape index: {2}]
  %s14 = inlined_call_operand.hbm [shape: f32[1,1], index: 14, kind: output, shape index: {3}]
  %15 = xla_tuple %s11, %s12, %s13, %s14
  %s16 = sld [smem:[#allocation0]]
  $region110: #{tpu_custom_call.1} parent=0
    _
  %s18 = ssub.s32 1, %s16
  %s19 = scalar_select 0, %s18, %s16
  $region1: #{tpu_custom_call.1} parent=0
    #allocation2 [shape = 'u8[16384]{0}', space=vmem, size = 0x4000, scoped, tag = 'input window, operand 0, single buffered']
    #allocation3 [shape = 's32[1]{0}', space=sflag, size = 0x4, scoped, tag = 'scoped memory for tpu_custom_call.1']
    #allocation4 [shape = 's32[1]{0}', space=sflag, size = 0x4, scoped, tag = 'scoped memory for tpu_custom_call.1']
    #allocation5 [shape = 'u8[16384]{0}', space=vmem, size = 0x4000, scoped, tag = 'input window, operand 1, single buffered']
    #allocation6 [shape = 's32[1]{0}', space=sflag, size = 0x4, scoped, tag = 'scoped memory for tpu_custom_call.1']
    #allocation7 [shape = 'u8[2048]{0}', space=vmem, size = 0x800, scoped, tag = 'input window, operand 2, single buffered']
    #allocation8 [shape = 'u8[16384]{0}', space=vmem, size = 0x4000, scoped, tag = 'input window, operand 3, single buffered']
    #allocation9 [shape = 's32[1]{0}', space=sflag, size = 0x4, scoped, tag = 'scoped memory for tpu_custom_call.1']
    #allocation10 [shape = 'u8[65536]{0}', space=vmem, size = 0x10000, scoped, tag = 'input window, operand 5, single buffered']
    #allocation11 [shape = 'u8[512]{0}', space=vmem, size = 0x400, scoped, tag = 'input window, operand 6, single buffered']
    #allocation12 [shape = 's32[1]{0}', space=sflag, size = 0x4, scoped, tag = 'scoped memory for tpu_custom_call.1']
    #allocation13 [shape = 'u8[262144]{0}', space=vmem, size = 0x40000, scoped, tag = 'input window, operand 7, single buffered']
    #allocation14 [shape = 'u8[2048]{0}', space=vmem, size = 0x800, scoped, tag = 'input window, operand 8, single buffered']
    #allocation15 [shape = 's32[1]{0}', space=sflag, size = 0x4, scoped, tag = 'scoped memory for tpu_custom_call.1']
    #allocation16 [shape = 'u8[16384]{0}', space=vmem, size = 0x4000, scoped, tag = 'output window, operand 0, single buffered']
    #allocation17 [shape = 'u8[2048]{0}', space=vmem, size = 0x800, scoped, tag = 'output window, operand 1, single buffered']
    #allocation18 [shape = 's32[1]{0}', space=sflag, size = 0x4, scoped, tag = 'scoped memory for tpu_custom_call.1']
    #allocation19 [shape = 'u8[512]{0}', space=vmem, size = 0x400, scoped, tag = 'output window, operand 2, single buffered']
    #allocation20 [shape = 'u8[512]{0}', space=vmem, size = 0x400, scoped, tag = 'output window, operand 3, single buffered']
    #allocation21 [shape = 's32[1]{0}', space=sflag, size = 0x4, scoped, tag = 'scoped memory for tpu_custom_call.1']
    %20 = vsyncpa [#allocation3], 0
    %21 = vsyncpa [#allocation6], 0
    %22 = vsyncpa [#allocation9], 0
    %23 = vsyncpa [#allocation12], 0
    %24 = vsyncpa [#allocation15], 0
    %25 = vsyncpa [#allocation4], 0
    %26 = vsyncpa [#allocation18], 0
    %27 = vsyncpa [#allocation21], 0
    // Predicated region
    $region2: #{tpu_custom_call.1} parent=1 // pred_check
      _
    $region3: #{tpu_custom_call.1} parent=1 // pred_check_branch
      %29 = sbr.rel (0) target = $region5
    $region4: #{tpu_custom_call.1} parent=1 // pred_region
      %s31 = ssub.s32 512, 512
      %32 = vsyncadd [#allocation3], %s31
      %s33 = sshll.u32 [#allocation2], 4
      %s34 = int_to_ptr.vmem [resolvable:$true] %s33
      %39 = dma.hbm_to_vmem [thread:$0]  %s0, 512, %s34, [#allocation3], 128, 128, 8
    $region5: #{tpu_custom_call.1} parent=1 // pred_fallthru
      _
    // Predicated region
    $region6: #{tpu_custom_call.1} parent=1 // pred_check
      _
    $region7: #{tpu_custom_call.1} parent=1 // pred_check_branch
      %41 = sbr.rel (0) target = $region9
    $region8: #{tpu_custom_call.1} parent=1 // pred_region
      %s43 = ssub.s32 512, 512
      %44 = vsyncadd [#allocation6], %s43
      %s45 = sshll.u32 [#allocation5], 4
      %s46 = int_to_ptr.vmem [resolvable:$true] %s45
      %51 = dma.hbm_to_vmem [thread:$0]  %s1, 512, %s46, [#allocation6], 128, 128, 8
    $region9: #{tpu_custom_call.1} parent=1 // pred_fallthru
      _
    // Predicated region
    $region10: #{tpu_custom_call.1} parent=1 // pred_check
      _
    $region11: #{tpu_custom_call.1} parent=1 // pred_check_branch
      %53 = sbr.rel (0) target = $region13
    $region12: #{tpu_custom_call.1} parent=1 // pred_region
      %s55 = ssub.s32 64, 64
      %56 = vsyncadd [#allocation6], %s55
      %s58 = sshll.u32 [#allocation7], 4
      %s59 = int_to_ptr.vmem [resolvable:$true] %s58
      %61 = dma.hbm_to_vmem [thread:$0]  %s2, 64, %s59, [#allocation6]
    $region13: #{tpu_custom_call.1} parent=1 // pred_fallthru
      _
    // Predicated region
    $region14: #{tpu_custom_call.1} parent=1 // pred_check
      _
    $region15: #{tpu_custom_call.1} parent=1 // pred_check_branch
      %63 = sbr.rel (0) target = $region17
    $region16: #{tpu_custom_call.1} parent=1 // pred_region
      %s65 = ssub.s32 512, 512
      %66 = vsyncadd [#allocation9], %s65
      %s67 = sshll.u32 [#allocation8], 4
      %s68 = int_to_ptr.vmem [resolvable:$true] %s67
      %73 = dma.hbm_to_vmem [thread:$0]  %s3, 512, %s68, [#allocation9], 128, 128, 8
    $region17: #{tpu_custom_call.1} parent=1 // pred_fallthru
      _
    // Predicated region
    $region18: #{tpu_custom_call.1} parent=1 // pred_check
      _
    $region19: #{tpu_custom_call.1} parent=1 // pred_check_branch
      %75 = sbr.rel (0) target = $region21
    $region20: #{tpu_custom_call.1} parent=1 // pred_region
      _
    $region21: #{tpu_custom_call.1} parent=1 // pred_fallthru
      _
    // Predicated region
    $region22: #{tpu_custom_call.1} parent=1 // pred_check
      _
    $region23: #{tpu_custom_call.1} parent=1 // pred_check_branch
      %77 = sbr.rel (0) target = $region25
    $region24: #{tpu_custom_call.1} parent=1 // pred_region
      %s79 = ssub.s32 2048, 2048
      %80 = vsyncadd [#allocation9], %s79
      %s81 = sshll.u32 [#allocation10], 4
      %s82 = int_to_ptr.vmem [resolvable:$true] %s81
      %87 = dma.hbm_to_vmem [thread:$0]  %s5, 2048, %s82, [#allocation9], 128, 128, 8
    $region25: #{tpu_custom_call.1} parent=1 // pred_fallthru
      _
    // Predicated region
    $region26: #{tpu_custom_call.1} parent=1 // pred_check
      _
    $region27: #{tpu_custom_call.1} parent=1 // pred_check_branch
      %89 = sbr.rel (0) target = $region29
    $region28: #{tpu_custom_call.1} parent=1 // pred_region
      %s91 = ssub.s32 16, 16
      %92 = vsyncadd [#allocation12], %s91
      %s94 = sshll.u32 [#allocation11], 4
      %s95 = int_to_ptr.vmem [resolvable:$true] %s94
      %97 = dma.hbm_to_vmem [thread:$0]  %s6, 16, %s95, [#allocation12]
    $region29: #{tpu_custom_call.1} parent=1 // pred_fallthru
      _
    // Predicated region
    $region30: #{tpu_custom_call.1} parent=1 // pred_check
      _
    $region31: #{tpu_custom_call.1} parent=1 // pred_check_branch
      %99 = sbr.rel (0) target = $region33
    $region32: #{tpu_custom_call.1} parent=1 // pred_region
      %s101 = ssub.s32 8192, 8192
      %102 = vsyncadd [#allocation12], %s101
      %s103 = sshll.u32 [#allocation13], 4
      %s104 = int_to_ptr.vmem [resolvable:$true] %s103
      %109 = dma.hbm_to_vmem [thread:$0]  %s7, 8192, %s104, [#allocation12], 512, 512, 32
    $region33: #{tpu_custom_call.1} parent=1 // pred_fallthru
      _
    // Predicated region
    $region34: #{tpu_custom_call.1} parent=1 // pred_check
      _
    $region35: #{tpu_custom_call.1} parent=1 // pred_check_branch
      %111 = sbr.rel (0) target = $region37
    $region36: #{tpu_custom_call.1} parent=1 // pred_region
      %s113 = ssub.s32 64, 64
      %114 = vsyncadd [#allocation15], %s113
      %s116 = sshll.u32 [#allocation14], 4
      %s117 = int_to_ptr.vmem [resolvable:$true] %s116
      %119 = dma.hbm_to_vmem [thread:$0]  %s8, 64, %s117, [#allocation15]
    $region37: #{tpu_custom_call.1} parent=1 // pred_fallthru
      _
    // Predicated region
    $region38: #{tpu_custom_call.1} parent=1 // pred_check
      _
    $region39: #{tpu_custom_call.1} parent=1 // pred_check_branch
      %121 = sbr.rel (0) target = $region41
    $region40: #{tpu_custom_call.1} parent=1 // pred_region
      _
    $region41: #{tpu_custom_call.1} parent=1 // pred_fallthru
      _
    // Predicated region
    $region42: #{tpu_custom_call.1} parent=1 // pred_check
      _
    $region43: #{tpu_custom_call.1} parent=1 // pred_check_branch
      %123 = sbr.rel (0) target = $region45
    $region44: #{tpu_custom_call.1} parent=1 // pred_region
      _
    $region45: #{tpu_custom_call.1} parent=1 // pred_fallthru
      _
    // Predicated region
    $region46: #{tpu_custom_call.1} parent=1 // pred_check
      _
    $region47: #{tpu_custom_call.1} parent=1 // pred_check_branch
      %125 = sbr.rel (0) target = $region49
    $region48: #{tpu_custom_call.1} parent=1 // pred_region
      %126 = dma.done [#allocation3], 512
    $region49: #{tpu_custom_call.1} parent=1 // pred_fallthru
      _
    // Predicated region
    $region50: #{tpu_custom_call.1} parent=1 // pred_check
      _
    $region51: #{tpu_custom_call.1} parent=1 // pred_check_branch
      %128 = sbr.rel (0) target = $region53
    $region52: #{tpu_custom_call.1} parent=1 // pred_region
      %129 = dma.done [#allocation6], 512
    $region53: #{tpu_custom_call.1} parent=1 // pred_fallthru
      _
    // Predicated region
    $region54: #{tpu_custom_call.1} parent=1 // pred_check
      _
    $region55: #{tpu_custom_call.1} parent=1 // pred_check_branch
      %131 = sbr.rel (0) target = $region57
    $region56: #{tpu_custom_call.1} parent=1 // pred_region
      %132 = dma.done [#allocation6], 64
    $region57: #{tpu_custom_call.1} parent=1 // pred_fallthru
      _
    // Predicated region
    $region58: #{tpu_custom_call.1} parent=1 // pred_check
      _
    $region59: #{tpu_custom_call.1} parent=1 // pred_check_branch
      %134 = sbr.rel (0) target = $region61
    $region60: #{tpu_custom_call.1} parent=1 // pred_region
      %135 = dma.done [#allocation9], 512
    $region61: #{tpu_custom_call.1} parent=1 // pred_fallthru
      _
    // Predicated region
    $region62: #{tpu_custom_call.1} parent=1 // pred_check
      _
    $region63: #{tpu_custom_call.1} parent=1 // pred_check_branch
      %137 = sbr.rel (0) target = $region65
    $region64: #{tpu_custom_call.1} parent=1 // pred_region
      %138 = dma.done [#allocation9], 2048
    $region65: #{tpu_custom_call.1} parent=1 // pred_fallthru
      _
    // Predicated region
    $region66: #{tpu_custom_call.1} parent=1 // pred_check
      _
    $region67: #{tpu_custom_call.1} parent=1 // pred_check_branch
      %140 = sbr.rel (0) target = $region69
    $region68: #{tpu_custom_call.1} parent=1 // pred_region
      %141 = dma.done [#allocation12], 16
    $region69: #{tpu_custom_call.1} parent=1 // pred_fallthru
      _
    // Predicated region
    $region70: #{tpu_custom_call.1} parent=1 // pred_check
      _
    $region71: #{tpu_custom_call.1} parent=1 // pred_check_branch
      %143 = sbr.rel (0) target = $region73
    $region72: #{tpu_custom_call.1} parent=1 // pred_region
      %144 = dma.done [#allocation12], 8192
    $region73: #{tpu_custom_call.1} parent=1 // pred_fallthru
      _
    // Predicated region
    $region74: #{tpu_custom_call.1} parent=1 // pred_check
      _
    $region75: #{tpu_custom_call.1} parent=1 // pred_check_branch
      %146 = sbr.rel (0) target = $region77
    $region76: #{tpu_custom_call.1} parent=1 // pred_region
      %147 = dma.done [#allocation15], 64
    $region77: #{tpu_custom_call.1} parent=1 // pred_fallthru
      _
    %v149 = vld [vmem:[#allocation2] sm:$0xff]
    %v150 = vld [vmem:[#allocation2 + $0x8] sm:$0xff]
    %v151 = vld [vmem:[#allocation2 + $0x10] sm:$0xff]
    %v152 = vld [vmem:[#allocation2 + $0x18] sm:$0xff]
    %v153 = vpack.c.bf16 %v150, %v149
    %v154 = vpack.c.bf16 %v152, %v151
    %v155 = vld [vmem:[#allocation5] sm:$0xff]
    %v156 = vld [vmem:[#allocation5 + $0x8] sm:$0xff]
    %v157 = vld [vmem:[#allocation5 + $0x10] sm:$0xff]
    %v158 = vld [vmem:[#allocation5 + $0x18] sm:$0xff]
    %v159 = vld [vmem:[#allocation8] sm:$0xff]
    %v160 = vld [vmem:[#allocation8 + $0x8] sm:$0xff]
    %v161 = vld [vmem:[#allocation8 + $0x10] sm:$0xff]
    %v162 = vld [vmem:[#allocation8 + $0x18] sm:$0xff]
    %v163 = vld [vmem:[%s4] sm:$0x1]
    %v164 = vpack.c.bf16 %v156, %v155
    %v165 = vpack.c.bf16 %v158, %v157
    %v166 = vpack.c.bf16 %v160, %v159
    %v167 = vpack.c.bf16 %v162, %v161
    %vm168 = vcmask 261120
    %v170 = vsel %vm168, %v153, 0
    %v173 = vsel %vm168, %v154, 0
    %175 = vmatprep.subr.bf16.mxu0 0
    %176 = vmatpush1.bf16.msra.mxu0 %v164
    %177 = vmatprep.subr.bf16.mxu0 0
    %178 = vmatpush1.bf16.msra.mxu0 %v165
    %179 = vmatprep.subr.bf16.mxu0 0
    %180 = vmatpush1.bf16.msra.mxu0 0
    %181 = vmatprep.subr.bf16.mxu0 0
    %182 = vmatpush1.bf16.msra.mxu0 0
    %183 = vmatprep.subr.bf16.mxu0 0
    %184 = vmatpush1.bf16.msra.mxu0 0
    %185 = vmatprep.subr.bf16.mxu0 0
    %186 = vmatpush1.bf16.msra.mxu0 0
    %187 = vmatprep.subr.bf16.mxu0 0
    %188 = vmatpush1.bf16.msra.mxu0 0
    %189 = vmatprep.subr.bf16.mxu0 0
    %190 = vmatpush1.bf16.msra.mxu0 0
    %191 = vmatprep.subr.bf16.mxu0 0
    %192 = vmatpush1.bf16.msra.mxu0 0
    %193 = vmatprep.subr.bf16.mxu0 0
    %194 = vmatpush1.bf16.msra.mxu0 0
    %195 = vmatprep.subr.bf16.mxu0 0
    %196 = vmatpush1.bf16.msra.mxu0 0
    %197 = vmatprep.subr.bf16.mxu0 0
    %198 = vmatpush1.bf16.msra.mxu0 0
    %199 = vmatprep.subr.bf16.mxu0 0
    %200 = vmatpush1.bf16.msra.mxu0 0
    %201 = vmatprep.subr.bf16.mxu0 0
    %202 = vmatpush1.bf16.msra.mxu0 0
    %203 = vmatprep.subr.bf16.mxu0 0
    %204 = vmatpush1.bf16.msra.mxu0 0
    %205 = vmatprep.subr.bf16.mxu0 0
    %206 = vmatpush1.bf16.msra.mxu0 0
    %207 = vmatprep.mubr.bf16.mxu0 0
    %208 = vmatmul.mubr.bf16.gmra.mrb[0].mxu0 %v170
    %v209 = vpop.f32.mrb[0].mxu0
    %v210 = vadd.f32 0.0, %v209
    %v211 = vpop.f32.mrb[0].mxu0
    %v212 = vpop.f32.mrb[0].mxu0
    %v213 = vadd.f32 0.0, %v212
    %v214 = vpop.f32.mrb[0].mxu0
    %215 = vmatprep.mubr.bf16.mxu0 0
    %216 = vmatmul.mubr.bf16.gmra.mrb[0].mxu0 %v173
    %v217 = vpop.f32.mrb[0].mxu0
    %v218 = vadd.f32 0.0, %v217
    %v219 = vpop.f32.mrb[0].mxu0
    %v220 = vpop.f32.mrb[0].mxu0
    %v221 = vadd.f32 0.0, %v220
    %v222 = vpop.f32.mrb[0].mxu0
    %223 = vdwg.mxu0
    %v224 = vpack.c.bf16 %v213, %v210
    %v225 = vpack.c.bf16 %v221, %v218
    %v227 = vlaneseq
    %v228 = vshrl.u32 %v227, 7
    %v229 = vsub.s32 0, %v228
    %v230 = vrot.slane %v163, %v229
    %v233 = vsel %vm168, %v224, 0
    %v236 = vsel %vm168, %v225, 0
    %238 = vmatprep.subr.bf16.mxu0 0
    %239 = vmatpush1.bf16.msra.mxu0 %v166
    %240 = vmatprep.subr.bf16.mxu0 0
    %241 = vmatpush1.bf16.msra.mxu0 %v167
    %242 = vmatprep.subr.bf16.mxu0 0
    %243 = vmatpush1.bf16.msra.mxu0 0
    %244 = vmatprep.subr.bf16.mxu0 0
    %245 = vmatpush1.bf16.msra.mxu0 0
    %246 = vmatprep.subr.bf16.mxu0 0
    %247 = vmatpush1.bf16.msra.mxu0 0
    %248 = vmatprep.subr.bf16.mxu0 0
    %249 = vmatpush1.bf16.msra.mxu0 0
    %250 = vmatprep.subr.bf16.mxu0 0
    %251 = vmatpush1.bf16.msra.mxu0 0
    %252 = vmatprep.subr.bf16.mxu0 0
    %253 = vmatpush1.bf16.msra.mxu0 0
    %254 = vmatprep.subr.bf16.mxu0 0
    %255 = vmatpush1.bf16.msra.mxu0 0
    %256 = vmatprep.subr.bf16.mxu0 0
    %257 = vmatpush1.bf16.msra.mxu0 0
    %258 = vmatprep.subr.bf16.mxu0 0
    %259 = vmatpush1.bf16.msra.mxu0 0
    %260 = vmatprep.subr.bf16.mxu0 0
    %261 = vmatpush1.bf16.msra.mxu0 0
    %262 = vmatprep.subr.bf16.mxu0 0
    %263 = vmatpush1.bf16.msra.mxu0 0
    %264 = vmatprep.subr.bf16.mxu0 0
    %265 = vmatpush1.bf16.msra.mxu0 0
    %266 = vmatprep.subr.bf16.mxu0 0
    %267 = vmatpush1.bf16.msra.mxu0 0
    %268 = vmatprep.subr.bf16.mxu0 0
    %269 = vmatpush1.bf16.msra.mxu0 0
    %270 = vmatprep.mubr.bf16.mxu0 0
    %271 = vmatmul.mubr.bf16.gmra.mrb[0].mxu0 %v233
    %v272 = vpop.f32.mrb[0].mxu0
    %v273 = vadd.f32 %v230, %v272
    %v274 = vpop.f32.mrb[0].mxu0
    %v275 = vpop.f32.mrb[0].mxu0
    %v276 = vadd.f32 %v230, %v275
    %v277 = vpop.f32.mrb[0].mxu0
    %278 = vmatprep.mubr.bf16.mxu0 0
    %279 = vmatmul.mubr.bf16.gmra.mrb[0].mxu0 %v236
    %v280 = vpop.f32.mrb[0].mxu0
    %v281 = vadd.f32 %v230, %v280
    %v282 = vpop.f32.mrb[0].mxu0
    %v283 = vpop.f32.mrb[0].mxu0
    %v284 = vadd.f32 %v230, %v283
    %v285 = vpop.f32.mrb[0].mxu0
    %286 = vdwg.mxu0
    %v287 = vmax.f32 %v273, 0.0
    %v288 = vmax.f32 %v276, 0.0
    %v289 = vmax.f32 %v281, 0.0
    %v290 = vmax.f32 %v284, 0.0
    %v291 = vld [vmem:[#allocation10] sm:$0xff]
    %v292 = vld [vmem:[#allocation10 + $0x8] sm:$0xff]
    %v293 = vld [vmem:[#allocation10 + $0x10] sm:$0xff]
    %v294 = vld [vmem:[#allocation10 + $0x18] sm:$0xff]
    %v295 = vld [vmem:[#allocation10 + $0x20] sm:$0xff]
    %v296 = vld [vmem:[#allocation10 + $0x28] sm:$0xff]
    %v297 = vld [vmem:[#allocation10 + $0x30] sm:$0xff]
    %v298 = vld [vmem:[#allocation10 + $0x38] sm:$0xff]
    %v299 = vld [vmem:[#allocation10 + $0x40] sm:$0xff]
    %v300 = vld [vmem:[#allocation10 + $0x48] sm:$0xff]
    %v301 = vld [vmem:[#allocation10 + $0x50] sm:$0xff]
    %v302 = vld [vmem:[#allocation10 + $0x58] sm:$0xff]
    %v303 = vld [vmem:[#allocation10 + $0x60] sm:$0xff]
    %v304 = vld [vmem:[#allocation10 + $0x68] sm:$0xff]
    %v305 = vld [vmem:[#allocation10 + $0x70] sm:$0xff]
    %v306 = vld [vmem:[#allocation10 + $0x78] sm:$0xff]
    %v307 = vld [vmem:[#allocation11] sm:$0x1]
    %v308 = vpack.c.bf16 %v288, %v287
    %v309 = vpack.c.bf16 %v290, %v289
    %v310 = vpack.c.bf16 %v292, %v291
    %v311 = vpack.c.bf16 %v294, %v293
    %v312 = vpack.c.bf16 %v296, %v295
    %v313 = vpack.c.bf16 %v298, %v297
    %v314 = vpack.c.bf16 %v300, %v299
    %v315 = vpack.c.bf16 %v302, %v301
    %v316 = vpack.c.bf16 %v304, %v303
    %v317 = vpack.c.bf16 %v306, %v305
    %318 = vmatprep.subr.bf16.mxu0 0
    %319 = vmatpush1.bf16.msra.mxu0 %v308
    %320 = vmatprep.subr.bf16.mxu0 0
    %321 = vmatpush1.bf16.msra.mxu0 %v309
    %322 = vmatprep.subr.bf16.mxu0 0
    %323 = vmatpush1.bf16.msra.mxu0 0
    %324 = vmatprep.subr.bf16.mxu0 0
    %325 = vmatpush1.bf16.msra.mxu0 0
    %326 = vmatprep.subr.bf16.mxu0 0
    %327 = vmatpush1.bf16.msra.mxu0 0
    %328 = vmatprep.subr.bf16.mxu0 0
    %329 = vmatpush1.bf16.msra.mxu0 0
    %330 = vmatprep.subr.bf16.mxu0 0
    %331 = vmatpush1.bf16.msra.mxu0 0
    %332 = vmatprep.subr.bf16.mxu0 0
    %333 = vmatpush1.bf16.msra.mxu0 0
    %334 = vmatprep.subr.bf16.mxu0 0
    %335 = vmatpush1.bf16.msra.mxu0 0
    %336 = vmatprep.subr.bf16.mxu0 0
    %337 = vmatpush1.bf16.msra.mxu0 0
    %338 = vmatprep.subr.bf16.mxu0 0
    %339 = vmatpush1.bf16.msra.mxu0 0
    %340 = vmatprep.subr.bf16.mxu0 0
    %341 = vmatpush1.bf16.msra.mxu0 0
    %342 = vmatprep.subr.bf16.mxu0 0
    %343 = vmatpush1.bf16.msra.mxu0 0
    %344 = vmatprep.subr.bf16.mxu0 0
    %345 = vmatpush1.bf16.msra.mxu0 0
    %346 = vmatprep.subr.bf16.mxu0 0
    %347 = vmatpush1.bf16.msra.mxu0 0
    %348 = vmatprep.subr.bf16.mxu0 0
    %349 = vmatpush1.bf16.msra.mxu0 0
    %350 = vmatprep.mubr.bf16.mxu0 0
    %351 = vmatmul.mubr.bf16.gmra.mrb[0].mxu0 %v170
    %v352 = vpop.f32.mrb[0].mxu0
    %v353 = vadd.f32 0.0, %v352
    %v354 = vpop.f32.mrb[0].mxu0
    %v355 = vpop.f32.mrb[0].mxu0
    %v356 = vadd.f32 0.0, %v355
    %v357 = vpop.f32.mrb[0].mxu0
    %358 = vmatprep.mubr.bf16.mxu0 0
    %359 = vmatmul.mubr.bf16.gmra.mrb[0].mxu0 %v173
    %v360 = vpop.f32.mrb[0].mxu0
    %v361 = vadd.f32 0.0, %v360
    %v362 = vpop.f32.mrb[0].mxu0
    %v363 = vpop.f32.mrb[0].mxu0
    %v364 = vadd.f32 0.0, %v363
    %v365 = vpop.f32.mrb[0].mxu0
    %366 = vdwg.mxu0
    %v367 = vpack.c.bf16 %v356, %v353
    %v368 = vpack.c.bf16 %v364, %v361
    %v370 = vlaneseq
    %v371 = vshrl.u32 %v370, 7
    %v372 = vsub.s32 0, %v371
    %v373 = vrot.slane %v307, %v372
    %375 = vmatprep.subr.bf16.mxu0 0
    %376 = vmatpush1.bf16.msra.mxu0 %v310
    %377 = vmatprep.subr.bf16.mxu0 0
    %378 = vmatpush1.bf16.msra.mxu0 %v311
    %379 = vmatprep.subr.bf16.mxu0 0
    %380 = vmatpush1.bf16.msra.mxu0 %v312
    %381 = vmatprep.subr.bf16.mxu0 0
    %382 = vmatpush1.bf16.msra.mxu0 %v313
    %383 = vmatprep.subr.bf16.mxu0 0
    %384 = vmatpush1.bf16.msra.mxu0 %v314
    %385 = vmatprep.subr.bf16.mxu0 0
    %386 = vmatpush1.bf16.msra.mxu0 %v315
    %387 = vmatprep.subr.bf16.mxu0 0
    %388 = vmatpush1.bf16.msra.mxu0 %v316
    %389 = vmatprep.subr.bf16.mxu0 0
    %390 = vmatpush1.bf16.msra.mxu0 %v317
    %391 = vmatprep.subr.bf16.mxu0 0
    %392 = vmatpush1.bf16.msra.mxu0 0
    %393 = vmatprep.subr.bf16.mxu0 0
    %394 = vmatpush1.bf16.msra.mxu0 0
    %395 = vmatprep.subr.bf16.mxu0 0
    %396 = vmatpush1.bf16.msra.mxu0 0
    %397 = vmatprep.subr.bf16.mxu0 0
    %398 = vmatpush1.bf16.msra.mxu0 0
    %399 = vmatprep.subr.bf16.mxu0 0
    %400 = vmatpush1.bf16.msra.mxu0 0
    %401 = vmatprep.subr.bf16.mxu0 0
    %402 = vmatpush1.bf16.msra.mxu0 0
    %403 = vmatprep.subr.bf16.mxu0 0
    %404 = vmatpush1.bf16.msra.mxu0 0
    %405 = vmatprep.subr.bf16.mxu0 0
    %406 = vmatpush1.bf16.msra.mxu0 0
    %407 = vmatprep.mubr.bf16.mxu0 0
    %408 = vmatmul.mubr.bf16.gmra.mrb[0].mxu0 %v367
    %v409 = vpop.f32.mrb[0].mxu0
    %v410 = vadd.f32 %v373, %v409
    %v411 = vpop.f32.mrb[0].mxu0
    %v412 = vpop.f32.mrb[0].mxu0
    %v413 = vadd.f32 %v373, %v412
    %v414 = vpop.f32.mrb[0].mxu0
    %415 = vmatprep.mubr.bf16.mxu0 0
    %416 = vmatmul.mubr.bf16.gmra.mrb[0].mxu0 %v368
    %v417 = vpop.f32.mrb[0].mxu0
    %v418 = vadd.f32 %v373, %v417
    %v419 = vpop.f32.mrb[0].mxu0
    %v420 = vpop.f32.mrb[0].mxu0
    %v421 = vadd.f32 %v373, %v420
    %v422 = vpop.f32.mrb[0].mxu0
    %423 = vdwg.mxu0
    %v424 = vmax.f32 %v410, 0.0
    %v425 = vmax.f32 %v413, 0.0
    %v426 = vmax.f32 %v418, 0.0
    %v427 = vmax.f32 %v421, 0.0
    %v428 = vpack.c.bf16 %v425, %v424
    %v429 = vpack.c.bf16 %v427, %v426
    %v430 = vld [vmem:[#allocation13] sm:$0xff]
    %v431 = vld [vmem:[#allocation13 + $0x8] sm:$0xff]
    %v432 = vld [vmem:[#allocation13 + $0x10] sm:$0xff]
    %v433 = vld [vmem:[#allocation13 + $0x18] sm:$0xff]
    %v434 = vld [vmem:[#allocation13 + $0x20] sm:$0xff]
    %v435 = vld [vmem:[#allocation13 + $0x28] sm:$0xff]
    %v436 = vld [vmem:[#allocation13 + $0x30] sm:$0xff]
    %v437 = vld [vmem:[#allocation13 + $0x38] sm:$0xff]
    %v438 = vld [vmem:[#allocation13 + $0x40] sm:$0xff]
    %v439 = vld [vmem:[#allocation13 + $0x48] sm:$0xff]
    %v440 = vld [vmem:[#allocation13 + $0x50] sm:$0xff]
    %v441 = vld [vmem:[#allocation13 + $0x58] sm:$0xff]
    %v442 = vld [vmem:[#allocation13 + $0x60] sm:$0xff]
    %v443 = vld [vmem:[#allocation13 + $0x68] sm:$0xff]
    %v444 = vld [vmem:[#allocation13 + $0x70] sm:$0xff]
    %v445 = vld [vmem:[#allocation13 + $0x78] sm:$0xff]
    %v446 = vld [vmem:[#allocation13 + $0x80] sm:$0xff]
    %v447 = vld [vmem:[#allocation13 + $0x88] sm:$0xff]
    %v448 = vld [vmem:[#allocation13 + $0x90] sm:$0xff]
    %v449 = vld [vmem:[#allocation13 + $0x98] sm:$0xff]
    %v450 = vld [vmem:[#allocation13 + $0xa0] sm:$0xff]
    %v451 = vld [vmem:[#allocation13 + $0xa8] sm:$0xff]
    %v452 = vld [vmem:[#allocation13 + $0xb0] sm:$0xff]
    %v453 = vld [vmem:[#allocation13 + $0xb8] sm:$0xff]
    %v454 = vld [vmem:[#allocation13 + $0xc0] sm:$0xff]
    %v455 = vld [vmem:[#allocation13 + $0xc8] sm:$0xff]
    %v456 = vld [vmem:[#allocation13 + $0xd0] sm:$0xff]
    %v457 = vld [vmem:[#allocation13 + $0xd8] sm:$0xff]
    %v458 = vld [vmem:[#allocation13 + $0xe0] sm:$0xff]
    %v459 = vld [vmem:[#allocation13 + $0xe8] sm:$0xff]
    %v460 = vld [vmem:[#allocation13 + $0xf0] sm:$0xff]
    %v461 = vld [vmem:[#allocation13 + $0xf8] sm:$0xff]
    %v462 = vld [vmem:[#allocation13 + $0x100] sm:$0xff]
    %v463 = vld [vmem:[#allocation13 + $0x108] sm:$0xff]
    %v464 = vld [vmem:[#allocation13 + $0x110] sm:$0xff]
    %v465 = vld [vmem:[#allocation13 + $0x118] sm:$0xff]
    %v466 = vld [vmem:[#allocation13 + $0x120] sm:$0xff]
    %v467 = vld [vmem:[#allocation13 + $0x128] sm:$0xff]
    %v468 = vld [vmem:[#allocation13 + $0x130] sm:$0xff]
    %v469 = vld [vmem:[#allocation13 + $0x138] sm:$0xff]
    %v470 = vld [vmem:[#allocation13 + $0x140] sm:$0xff]
    %v471 = vld [vmem:[#allocation13 + $0x148] sm:$0xff]
    %v472 = vld [vmem:[#allocation13 + $0x150] sm:$0xff]
    %v473 = vld [vmem:[#allocation13 + $0x158] sm:$0xff]
    %v474 = vld [vmem:[#allocation13 + $0x160] sm:$0xff]
    %v475 = vld [vmem:[#allocation13 + $0x168] sm:$0xff]
    %v476 = vld [vmem:[#allocation13 + $0x170] sm:$0xff]
    %v477 = vld [vmem:[#allocation13 + $0x178] sm:$0xff]
    %v478 = vld [vmem:[#allocation13 + $0x180] sm:$0xff]
    %v479 = vld [vmem:[#allocation13 + $0x188] sm:$0xff]
    %v480 = vld [vmem:[#allocation13 + $0x190] sm:$0xff]
    %v481 = vld [vmem:[#allocation13 + $0x198] sm:$0xff]
    %v482 = vld [vmem:[#allocation13 + $0x1a0] sm:$0xff]
    %v483 = vld [vmem:[#allocation13 + $0x1a8] sm:$0xff]
    %v484 = vld [vmem:[#allocation13 + $0x1b0] sm:$0xff]
    %v485 = vld [vmem:[#allocation13 + $0x1b8] sm:$0xff]
    %v486 = vld [vmem:[#allocation13 + $0x1c0] sm:$0xff]
    %v487 = vld [vmem:[#allocation13 + $0x1c8] sm:$0xff]
    %v488 = vld [vmem:[#allocation13 + $0x1d0] sm:$0xff]
    %v489 = vld [vmem:[#allocation13 + $0x1d8] sm:$0xff]
    %v490 = vld [vmem:[#allocation13 + $0x1e0] sm:$0xff]
    %v491 = vld [vmem:[#allocation13 + $0x1e8] sm:$0xff]
    %v492 = vld [vmem:[#allocation13 + $0x1f0] sm:$0xff]
    %v493 = vld [vmem:[#allocation13 + $0x1f8] sm:$0xff]
    %v494 = vpack.c.bf16 %v434, %v430
    %v495 = vpack.c.bf16 %v435, %v431
    %v496 = vpack.c.bf16 %v436, %v432
    %v497 = vpack.c.bf16 %v437, %v433
    %v498 = vpack.c.bf16 %v442, %v438
    %v499 = vpack.c.bf16 %v443, %v439
    %v500 = vpack.c.bf16 %v444, %v440
    %v501 = vpack.c.bf16 %v445, %v441
    %v502 = vpack.c.bf16 %v450, %v446
    %v503 = vpack.c.bf16 %v451, %v447
    %v504 = vpack.c.bf16 %v452, %v448
    %v505 = vpack.c.bf16 %v453, %v449
    %v506 = vpack.c.bf16 %v458, %v454
    %v507 = vpack.c.bf16 %v459, %v455
    %v508 = vpack.c.bf16 %v460, %v456
    %v509 = vpack.c.bf16 %v461, %v457
    %v510 = vpack.c.bf16 %v466, %v462
    %v511 = vpack.c.bf16 %v467, %v463
    %v512 = vpack.c.bf16 %v468, %v464
    %v513 = vpack.c.bf16 %v469, %v465
    %v514 = vpack.c.bf16 %v474, %v470
    %v515 = vpack.c.bf16 %v475, %v471
    %v516 = vpack.c.bf16 %v476, %v472
    %v517 = vpack.c.bf16 %v477, %v473
    %v518 = vpack.c.bf16 %v482, %v478
    %v519 = vpack.c.bf16 %v483, %v479
    %v520 = vpack.c.bf16 %v484, %v480
    %v521 = vpack.c.bf16 %v485, %v481
    %v522 = vpack.c.bf16 %v490, %v486
    %v523 = vpack.c.bf16 %v491, %v487
    %v524 = vpack.c.bf16 %v492, %v488
    %v525 = vpack.c.bf16 %v493, %v489
    %v526 = vld [vmem:[#allocation14] sm:$0xf]
    %v528 = vlaneseq
    %v529 = vshrl.u32 %v528, 7
    %v530 = vsub.s32 0, %v529
    %v531 = vrot.slane %v526, %v530
    %v532 = vlaneseq
    %v533 = vshrl.u32 %v532, 7
    %v534 = vsub.s32 1, %v533
    %v535 = vrot.slane %v526, %v534
    %v536 = vlaneseq
    %v537 = vshrl.u32 %v536, 7
    %v538 = vsub.s32 2, %v537
    %v539 = vrot.slane %v526, %v538
    %v540 = vlaneseq
    %v541 = vshrl.u32 %v540, 7
    %v542 = vsub.s32 3, %v541
    %v543 = vrot.slane %v526, %v542
    %548 = vmatprep.subr.bf16.mxu0 %v495
    %549 = vmatpush1.bf16.msra.mxu0 %v494
    %550 = vmatprep.subr.bf16.mxu0 %v499
    %551 = vmatpush1.bf16.msra.mxu0 %v498
    %552 = vmatprep.subr.bf16.mxu0 %v503
    %553 = vmatpush1.bf16.msra.mxu0 %v502
    %554 = vmatprep.subr.bf16.mxu0 %v507
    %555 = vmatpush1.bf16.msra.mxu0 %v506
    %556 = vmatprep.subr.bf16.mxu0 %v511
    %557 = vmatpush1.bf16.msra.mxu0 %v510
    %558 = vmatprep.subr.bf16.mxu0 %v515
    %559 = vmatpush1.bf16.msra.mxu0 %v514
    %560 = vmatprep.subr.bf16.mxu0 %v519
    %561 = vmatpush1.bf16.msra.mxu0 %v518
    %562 = vmatprep.subr.bf16.mxu0 %v523
    %563 = vmatpush1.bf16.msra.mxu0 %v522
    %564 = vmatprep.subr.bf16.mxu0 0
    %565 = vmatpush1.bf16.msra.mxu0 0
    %566 = vmatprep.subr.bf16.mxu0 0
    %567 = vmatpush1.bf16.msra.mxu0 0
    %568 = vmatprep.subr.bf16.mxu0 0
    %569 = vmatpush1.bf16.msra.mxu0 0
    %570 = vmatprep.subr.bf16.mxu0 0
    %571 = vmatpush1.bf16.msra.mxu0 0
    %572 = vmatprep.subr.bf16.mxu0 0
    %573 = vmatpush1.bf16.msra.mxu0 0
    %574 = vmatprep.subr.bf16.mxu0 0
    %575 = vmatpush1.bf16.msra.mxu0 0
    %576 = vmatprep.subr.bf16.mxu0 0
    %577 = vmatpush1.bf16.msra.mxu0 0
    %578 = vmatprep.subr.bf16.mxu0 0
    %579 = vmatpush1.bf16.msra.mxu0 0
    %580 = vmatprep.mubr.bf16.mxu0 0
    %581 = vmatmul.mubr.bf16.gmra.mrb[0].mxu0 %v428
    %v582 = vpop.f32.mrb[0].mxu0
    %v583 = vadd.f32 %v531, %v582
    %v584 = vpop.f32.mrb[0].mxu0
    %v585 = vadd.f32 %v535, %v584
    %v586 = vpop.f32.mrb[0].mxu0
    %v587 = vadd.f32 %v531, %v586
    %v588 = vpop.f32.mrb[0].mxu0
    %v589 = vadd.f32 %v535, %v588
    %590 = vmatprep.mubr.bf16.mxu0 0
    %591 = vmatmul.mubr.bf16.gmra.mrb[0].mxu0 %v429
    %v592 = vpop.f32.mrb[0].mxu0
    %v593 = vadd.f32 %v531, %v592
    %v594 = vpop.f32.mrb[0].mxu0
    %v595 = vadd.f32 %v535, %v594
    %v596 = vpop.f32.mrb[0].mxu0
    %v597 = vadd.f32 %v531, %v596
    %v598 = vpop.f32.mrb[0].mxu0
    %v599 = vadd.f32 %v535, %v598
    %600 = vdwg.mxu0
    %601 = vmatprep.subr.bf16.mxu0 %v497
    %602 = vmatpush1.bf16.msra.mxu0 %v496
    %603 = vmatprep.subr.bf16.mxu0 %v501
    %604 = vmatpush1.bf16.msra.mxu0 %v500
    %605 = vmatprep.subr.bf16.mxu0 %v505
    %606 = vmatpush1.bf16.msra.mxu0 %v504
    %607 = vmatprep.subr.bf16.mxu0 %v509
    %608 = vmatpush1.bf16.msra.mxu0 %v508
    %609 = vmatprep.subr.bf16.mxu0 %v513
    %610 = vmatpush1.bf16.msra.mxu0 %v512
    %611 = vmatprep.subr.bf16.mxu0 %v517
    %612 = vmatpush1.bf16.msra.mxu0 %v516
    %613 = vmatprep.subr.bf16.mxu0 %v521
    %614 = vmatpush1.bf16.msra.mxu0 %v520
    %615 = vmatprep.subr.bf16.mxu0 %v525
    %616 = vmatpush1.bf16.msra.mxu0 %v524
    %617 = vmatprep.subr.bf16.mxu0 0
    %618 = vmatpush1.bf16.msra.mxu0 0
    %619 = vmatprep.subr.bf16.mxu0 0
    %620 = vmatpush1.bf16.msra.mxu0 0
    %621 = vmatprep.subr.bf16.mxu0 0
    %622 = vmatpush1.bf16.msra.mxu0 0
    %623 = vmatprep.subr.bf16.mxu0 0
    %624 = vmatpush1.bf16.msra.mxu0 0
    %625 = vmatprep.subr.bf16.mxu0 0
    %626 = vmatpush1.bf16.msra.mxu0 0
    %627 = vmatprep.subr.bf16.mxu0 0
    %628 = vmatpush1.bf16.msra.mxu0 0
    %629 = vmatprep.subr.bf16.mxu0 0
    %630 = vmatpush1.bf16.msra.mxu0 0
    %631 = vmatprep.subr.bf16.mxu0 0
    %632 = vmatpush1.bf16.msra.mxu0 0
    %633 = vmatprep.mubr.bf16.mxu0 0
    %634 = vmatmul.mubr.bf16.gmra.mrb[0].mxu0 %v428
    %v635 = vpop.f32.mrb[0].mxu0
    %v636 = vadd.f32 %v539, %v635
    %v637 = vpop.f32.mrb[0].mxu0
    %v638 = vadd.f32 %v543, %v637
    %v639 = vpop.f32.mrb[0].mxu0
    %v640 = vadd.f32 %v539, %v639
    %v641 = vpop.f32.mrb[0].mxu0
    %v642 = vadd.f32 %v543, %v641
    %643 = vmatprep.mubr.bf16.mxu0 0
    %644 = vmatmul.mubr.bf16.gmra.mrb[0].mxu0 %v429
    %v645 = vpop.f32.mrb[0].mxu0
    %v646 = vadd.f32 %v539, %v645
    %v647 = vpop.f32.mrb[0].mxu0
    %v648 = vadd.f32 %v543, %v647
    %v649 = vpop.f32.mrb[0].mxu0
    %v650 = vadd.f32 %v539, %v649
    %v651 = vpop.f32.mrb[0].mxu0
    %v652 = vadd.f32 %v543, %v651
    %653 = vdwg.mxu0
    %v654 = vld [vmem:[#allocation7] sm:$0xf]
    %v655 = vsub.f32 0.0, %v638
    %v656 = vsub.f32 0.0, %v642
    %v657 = vsub.f32 0.0, %v648
    %v658 = vsub.f32 0.0, %v652
    %v659 = vmul.f32 %v655, 1.442695
    %v660 = vpow.pop %v659
    %v661 = vmul.f32 %v656, 1.442695
    %v662 = vpow.pop %v661
    %v663 = vmul.f32 %v657, 1.442695
    %v664 = vpow.pop %v663
    %v665 = vmul.f32 %v658, 1.442695
    %v666 = vpow.pop %v665
    %v668 = vsel %vm168, %v654, 0
    %670 = vmatprep.subr.mxu0 0.0
    %671 = vmatpush1.msra.mxu0 %v660
    %672 = vmatprep.subr.mxu0 0.0
    %673 = vmatpush1.msra.mxu0 %v662
    %674 = vmatprep.subr.mxu0 0.0
    %675 = vmatpush1.msra.mxu0 %v664
    %676 = vmatprep.subr.mxu0 0.0
    %677 = vmatpush1.msra.mxu0 %v666
    %678 = vmatprep.subr.mxu0 0.0
    %679 = vmatpush1.msra.mxu0 0.0
    %680 = vmatprep.subr.mxu0 0.0
    %681 = vmatpush1.msra.mxu0 0.0
    %682 = vmatprep.subr.mxu0 0.0
    %683 = vmatpush1.msra.mxu0 0.0
    %684 = vmatprep.subr.mxu0 0.0
    %685 = vmatpush1.msra.mxu0 0.0
    %686 = vmatprep.subr.mxu0 0.0
    %687 = vmatpush1.msra.mxu0 0.0
    %688 = vmatprep.subr.mxu0 0.0
    %689 = vmatpush1.msra.mxu0 0.0
    %690 = vmatprep.subr.mxu0 0.0
    %691 = vmatpush1.msra.mxu0 0.0
    %692 = vmatprep.subr.mxu0 0.0
    %693 = vmatpush1.msra.mxu0 0.0
    %694 = vmatprep.subr.mxu0 0.0
    %695 = vmatpush1.msra.mxu0 0.0
    %696 = vmatprep.subr.mxu0 0.0
    %697 = vmatpush1.msra.mxu0 0.0
    %698 = vmatprep.subr.mxu0 0.0
    %699 = vmatpush1.msra.mxu0 0.0
    %700 = vmatprep.subr.mxu0 0.0
    %701 = vmatpush1.msra.mxu0 0.0
    %702 = vmatprep.subr.mxu0 0.0
    %703 = vmatpush1.msra.mxu0 0.0
    %704 = vmatprep.subr.mxu0 0.0
    %705 = vmatpush1.msra.mxu0 0.0
    %706 = vmatprep.subr.mxu0 0.0
    %707 = vmatpush1.msra.mxu0 0.0
    %708 = vmatprep.subr.mxu0 0.0
    %709 = vmatpush1.msra.mxu0 0.0
    %710 = vmatprep.subr.mxu0 0.0
    %711 = vmatpush1.msra.mxu0 0.0
    %712 = vmatprep.subr.mxu0 0.0
    %713 = vmatpush1.msra.mxu0 0.0
    %714 = vmatprep.subr.mxu0 0.0
    %715 = vmatpush1.msra.mxu0 0.0
    %716 = vmatprep.subr.mxu0 0.0
    %717 = vmatpush1.msra.mxu0 0.0
    %718 = vmatprep.subr.mxu0 0.0
    %719 = vmatpush1.msra.mxu0 0.0
    %720 = vmatprep.subr.mxu0 0.0
    %721 = vmatpush1.msra.mxu0 0.0
    %722 = vmatprep.subr.mxu0 0.0
    %723 = vmatpush1.msra.mxu0 0.0
    %724 = vmatprep.subr.mxu0 0.0
    %725 = vmatpush1.msra.mxu0 0.0
    %726 = vmatprep.subr.mxu0 0.0
    %727 = vmatpush1.msra.mxu0 0.0
    %728 = vmatprep.subr.mxu0 0.0
    %729 = vmatpush1.msra.mxu0 0.0
    %730 = vmatprep.subr.mxu0 0.0
    %731 = vmatpush1.msra.mxu0 0.0
    %732 = vmatprep.subr.mxu0 0.0
    %733 = vmatpush1.msra.mxu0 0.0
    %734 = vmatprep.mubr.f32.mxu0 0.0
    %735 = vmatmul.mubr.f32.gmra.mrb[0].mxu0 %v668
    %v736 = vpop.f32.mrb[0].mxu0
    %v737 = vadd.f32 0.0, %v736
    %v738 = vpop.f32.mrb[0].mxu0
    %739 = vdwg.mxu0
    %v740 = vmax.f32 %v737, 1e-08
    %v741 = vrcp.pop %v740
    %v742 = vmul.f32 %v636, %v660
    %v743 = vmul.f32 %v640, %v662
    %v744 = vmul.f32 %v646, %v664
    %v745 = vmul.f32 %v650, %v666
    %746 = vmatprep.subr.mxu0 0.0
    %747 = vmatpush1.msra.mxu0 %v742
    %748 = vmatprep.subr.mxu0 0.0
    %749 = vmatpush1.msra.mxu0 %v743
    %750 = vmatprep.subr.mxu0 0.0
    %751 = vmatpush1.msra.mxu0 %v744
    %752 = vmatprep.subr.mxu0 0.0
    %753 = vmatpush1.msra.mxu0 %v745
    %754 = vmatprep.subr.mxu0 0.0
    %755 = vmatpush1.msra.mxu0 0.0
    %756 = vmatprep.subr.mxu0 0.0
    %757 = vmatpush1.msra.mxu0 0.0
    %758 = vmatprep.subr.mxu0 0.0
    %759 = vmatpush1.msra.mxu0 0.0
    %760 = vmatprep.subr.mxu0 0.0
    %761 = vmatpush1.msra.mxu0 0.0
    %762 = vmatprep.subr.mxu0 0.0
    %763 = vmatpush1.msra.mxu0 0.0
    %764 = vmatprep.subr.mxu0 0.0
    %765 = vmatpush1.msra.mxu0 0.0
    %766 = vmatprep.subr.mxu0 0.0
    %767 = vmatpush1.msra.mxu0 0.0
    %768 = vmatprep.subr.mxu0 0.0
    %769 = vmatpush1.msra.mxu0 0.0
    %770 = vmatprep.subr.mxu0 0.0
    %771 = vmatpush1.msra.mxu0 0.0
    %772 = vmatprep.subr.mxu0 0.0
    %773 = vmatpush1.msra.mxu0 0.0
    %774 = vmatprep.subr.mxu0 0.0
    %775 = vmatpush1.msra.mxu0 0.0
    %776 = vmatprep.subr.mxu0 0.0
    %777 = vmatpush1.msra.mxu0 0.0
    %778 = vmatprep.subr.mxu0 0.0
    %779 = vmatpush1.msra.mxu0 0.0
    %780 = vmatprep.subr.mxu0 0.0
    %781 = vmatpush1.msra.mxu0 0.0
    %782 = vmatprep.subr.mxu0 0.0
    %783 = vmatpush1.msra.mxu0 0.0
    %784 = vmatprep.subr.mxu0 0.0
    %785 = vmatpush1.msra.mxu0 0.0
    %786 = vmatprep.subr.mxu0 0.0
    %787 = vmatpush1.msra.mxu0 0.0
    %788 = vmatprep.subr.mxu0 0.0
    %789 = vmatpush1.msra.mxu0 0.0
    %790 = vmatprep.subr.mxu0 0.0
    %791 = vmatpush1.msra.mxu0 0.0
    %792 = vmatprep.subr.mxu0 0.0
    %793 = vmatpush1.msra.mxu0 0.0
    %794 = vmatprep.subr.mxu0 0.0
    %795 = vmatpush1.msra.mxu0 0.0
    %796 = vmatprep.subr.mxu0 0.0
    %797 = vmatpush1.msra.mxu0 0.0
    %798 = vmatprep.subr.mxu0 0.0
    %799 = vmatpush1.msra.mxu0 0.0
    %800 = vmatprep.subr.mxu0 0.0
    %801 = vmatpush1.msra.mxu0 0.0
    %802 = vmatprep.subr.mxu0 0.0
    %803 = vmatpush1.msra.mxu0 0.0
    %804 = vmatprep.subr.mxu0 0.0
    %805 = vmatpush1.msra.mxu0 0.0
    %806 = vmatprep.subr.mxu0 0.0
    %807 = vmatpush1.msra.mxu0 0.0
    %808 = vmatprep.subr.mxu0 0.0
    %809 = vmatpush1.msra.mxu0 0.0
    %810 = vmatprep.mubr.f32.mxu0 0.0
    %811 = vmatmul.mubr.f32.gmra.mrb[0].mxu0 %v668
    %v812 = vpop.f32.mrb[0].mxu0
    %v813 = vadd.f32 0.0, %v812
    %v814 = vpop.f32.mrb[0].mxu0
    %815 = vdwg.mxu0
    %v816 = vmul.f32 %v741, %v813
    %v817 = vlog2.pop %v740
    %v818 = vmul.f32 %v817, 0.6931472
    %v819 = vsub.f32 0.0, %v818
    %v820 = vadd.f32 %v585, 1.0
    %v821 = vadd.f32 %v589, 1.0
    %v822 = vadd.f32 %v595, 1.0
    %v823 = vadd.f32 %v599, 1.0
    %v824 = vmul.f32 %v583, %v583
    %v825 = vmul.f32 %v587, %v587
    %v826 = vmul.f32 %v593, %v593
    %v827 = vmul.f32 %v597, %v597
    %v828 = vsub.f32 %v820, %v824
    %v829 = vsub.f32 %v821, %v825
    %v830 = vsub.f32 %v822, %v826
    %v831 = vsub.f32 %v823, %v827
    %v832 = vmul.f32 %v585, 1.442695
    %v833 = vpow.pop %v832
    %v834 = vmul.f32 %v589, 1.442695
    %v835 = vpow.pop %v834
    %v836 = vmul.f32 %v595, 1.442695
    %v837 = vpow.pop %v836
    %v838 = vmul.f32 %v599, 1.442695
    %v839 = vpow.pop %v838
    %v840 = vsub.f32 %v828, %v833
    %v841 = vsub.f32 %v829, %v835
    %v842 = vsub.f32 %v830, %v837
    %v843 = vsub.f32 %v831, %v839
    %v844 = vadd.f32 %v840, %v841
    %v845 = vadd.f32 %v844, %v842
    %v846 = vadd.f32 %v845, %v843
    %847 = vadd.xlane.f32.xlu0 %v846
    %v848 = vpop.xlane.xlu0 %847
    %v849 = vrot.slane %v848, 4
    %v850 = vadd.f32 %v848, %v849
    %v851 = vrot.slane %v850, 2
    %v852 = vadd.f32 %v850, %v851
    %v853 = vrot.slane %v852, 1
    %v854 = vadd.f32 %v852, %v853
    %s855 = vtos %v854
    %s856 = smul.f32 %s855, -0.5
    %v857 = vadd.f32 %v819, 1.0
    %v858 = vmul.f32 %v816, %v816
    %v859 = vsub.f32 %v857, %v858
    %v860 = vmul.f32 %v819, 1.442695
    %v861 = vpow.pop %v860
    %v862 = vsub.f32 %v859, %v861
    %vm863 = vcmask 1043456
    %v864 = vsel %vm863, %v862, 0.0
    %865 = vadd.xlane.f32.xlu0 %v864
    %v866 = vpop.xlane.xlu0 %865
    %v867 = vrot.slane %v866, 4
    %v868 = vadd.f32 %v866, %v867
    %v869 = vrot.slane %v868, 2
    %v870 = vadd.f32 %v868, %v869
    %v871 = vrot.slane %v870, 1
    %v872 = vadd.f32 %v870, %v871
    %s873 = vtos %v872
    %s874 = smul.f32 %s873, -0.5
    %v875 = vstv %s856
    %vm876 = vcmask 0
    %877 = vst.msk [vmem:[#allocation19] sm:$0x1] %vm876, %v875
    %v878 = vstv %s874
    %879 = vst.msk [vmem:[#allocation20] sm:$0x1] %vm876, %v878
    %v880 = vld [vmem:[%s9] sm:$0xff]
    %v881 = vld [vmem:[%s9 + $0x8] sm:$0xff]
    %v882 = vld [vmem:[%s9 + $0x10] sm:$0xff]
    %v883 = vld [vmem:[%s9 + $0x18] sm:$0xff]
    %v884 = vmul.f32 %v585, 0.5
    %v885 = vmul.f32 %v589, 0.5
    %v886 = vmul.f32 %v595, 0.5
    %v887 = vmul.f32 %v599, 0.5
    %v888 = vmul.f32 %v884, 1.442695
    %v889 = vpow.pop %v888
    %v890 = vmul.f32 %v885, 1.442695
    %v891 = vpow.pop %v890
    %v892 = vmul.f32 %v886, 1.442695
    %v893 = vpow.pop %v892
    %v894 = vmul.f32 %v887, 1.442695
    %v895 = vpow.pop %v894
    %v896 = vmul.f32 %v880, %v889
    %v897 = vmul.f32 %v881, %v891
    %v898 = vmul.f32 %v882, %v893
    %v899 = vmul.f32 %v883, %v895
    %v900 = vadd.f32 %v583, %v896
    %v901 = vadd.f32 %v587, %v897
    %v902 = vadd.f32 %v593, %v898
    %v903 = vadd.f32 %v597, %v899
    %904 = vst [vmem:[#allocation16] sm:$0xff] %v900
    %905 = vst [vmem:[#allocation16 + $0x8] sm:$0xff] %v901
    %906 = vst [vmem:[#allocation16 + $0x10] sm:$0xff] %v902
    %907 = vst [vmem:[#allocation16 + $0x18] sm:$0xff] %v903
    %v908 = vld [vmem:[%s10] sm:$0xf]
    %v909 = vmul.f32 %v819, 0.5
    %v910 = vmul.f32 %v909, 1.442695
    %v911 = vpow.pop %v910
    %v912 = vmul.f32 %v908, %v911
    %v913 = vadd.f32 %v816, %v912
    %914 = vst [vmem:[#allocation17] sm:$0xf] %v913
    // Predicated region
    $region78: #{tpu_custom_call.1} parent=1 // pred_check
      _
    $region79: #{tpu_custom_call.1} parent=1 // pred_check_branch
      %916 = sbr.rel (0) target = $region81
    $region80: #{tpu_custom_call.1} parent=1 // pred_region
      %s918 = ssub.s32 512, 512
      %919 = vsyncadd [#allocation4], %s918
      %s920 = sshll.u32 [#allocation16], 4
      %s921 = int_to_ptr.vmem [resolvable:$true] %s920
      %926 = dma.vmem_to_hbm [thread:$0]  %s921, 512, %s11, [#allocation4], 128, 128, 8
    $region81: #{tpu_custom_call.1} parent=1 // pred_fallthru
      _
    // Predicated region
    $region82: #{tpu_custom_call.1} parent=1 // pred_check
      _
    $region83: #{tpu_custom_call.1} parent=1 // pred_check_branch
      %928 = sbr.rel (0) target = $region85
    $region84: #{tpu_custom_call.1} parent=1 // pred_region
      %s930 = ssub.s32 64, 64
      %931 = vsyncadd [#allocation18], %s930
      %s933 = sshll.u32 [#allocation17], 4
      %s934 = int_to_ptr.vmem [resolvable:$true] %s933
      %936 = dma.vmem_to_hbm [thread:$0]  %s934, 64, %s12, [#allocation18]
    $region85: #{tpu_custom_call.1} parent=1 // pred_fallthru
      _
    // Predicated region
    $region86: #{tpu_custom_call.1} parent=1 // pred_check
      _
    $region87: #{tpu_custom_call.1} parent=1 // pred_check_branch
      %938 = sbr.rel (0) target = $region89
    $region88: #{tpu_custom_call.1} parent=1 // pred_region
      %s940 = ssub.s32 16, 16
      %941 = vsyncadd [#allocation18], %s940
      %s943 = sshll.u32 [#allocation19], 4
      %s944 = int_to_ptr.vmem [resolvable:$true] %s943
      %946 = dma.vmem_to_hbm [thread:$0]  %s944, 16, %s13, [#allocation18]
    $region89: #{tpu_custom_call.1} parent=1 // pred_fallthru
      _
    // Predicated region
    $region90: #{tpu_custom_call.1} parent=1 // pred_check
      _
    $region91: #{tpu_custom_call.1} parent=1 // pred_check_branch
      %948 = sbr.rel (0) target = $region93
    $region92: #{tpu_custom_call.1} parent=1 // pred_region
      %s950 = ssub.s32 16, 16
      %951 = vsyncadd [#allocation21], %s950
      %s953 = sshll.u32 [#allocation20], 4
      %s954 = int_to_ptr.vmem [resolvable:$true] %s953
      %956 = dma.vmem_to_hbm [thread:$0]  %s954, 16, %s14, [#allocation21]
    $region93: #{tpu_custom_call.1} parent=1 // pred_fallthru
      _
    // Predicated region
    $region94: #{tpu_custom_call.1} parent=1 // pred_check
      _
    $region95: #{tpu_custom_call.1} parent=1 // pred_check_branch
      %958 = sbr.rel (0) target = $region97
    $region96: #{tpu_custom_call.1} parent=1 // pred_region
      %959 = dma.done [#allocation4], 512
    $region97: #{tpu_custom_call.1} parent=1 // pred_fallthru
      _
    // Predicated region
    $region98: #{tpu_custom_call.1} parent=1 // pred_check
      _
    $region99: #{tpu_custom_call.1} parent=1 // pred_check_branch
      %961 = sbr.rel (0) target = $region101
    $region100: #{tpu_custom_call.1} parent=1 // pred_region
      %962 = dma.done [#allocation18], 64
    $region101: #{tpu_custom_call.1} parent=1 // pred_fallthru
      _
    // Predicated region
    $region102: #{tpu_custom_call.1} parent=1 // pred_check
      _
    $region103: #{tpu_custom_call.1} parent=1 // pred_check_branch
      %964 = sbr.rel (0) target = $region105
    $region104: #{tpu_custom_call.1} parent=1 // pred_region
      %965 = dma.done [#allocation18], 16
    $region105: #{tpu_custom_call.1} parent=1 // pred_fallthru
      _
    // Predicated region
    $region106: #{tpu_custom_call.1} parent=1 // pred_check
      _
    $region107: #{tpu_custom_call.1} parent=1 // pred_check_branch
      %967 = sbr.rel (0) target = $region109
    $region108: #{tpu_custom_call.1} parent=1 // pred_region
      %968 = dma.done [#allocation21], 16
    $region109: #{tpu_custom_call.1} parent=1 // pred_fallthru
      _
    %969 = vsyncpa [#allocation3], 1
    %970 = vsyncpa [#allocation6], 1
    %971 = vsyncpa [#allocation9], 1
    %972 = vsyncpa [#allocation12], 1
    %973 = vsyncpa [#allocation15], 1
    %974 = vsyncpa [#allocation4], 1
    %975 = vsyncpa [#allocation18], 1
    %976 = vsyncpa [#allocation21], 1

</llo_original>
